<compile_context>
chip_gen: v6e
topology: v6e:2x2x1
jax: 0.10.0
libtpu: 0.0.40
codegen_flags: <defaults>
</compile_context>

<pallas_src>
import numpy as np
import jax
import jax.numpy as jnp
from jax.experimental import pallas as pl
from jax.experimental.pallas import tpu as pltpu


_NUM_CORE_SPLITS = 2  # per-core partials for v7x megacore; no-op on v5e/v6e.


def _round_up(x, m):
    return ((x + m - 1) // m) * m


def _build_violation_terms(embedding_metadata, target_feature_indices):
    """Replicates the PyTorch module's index bookkeeping.

    Returns a list of (pos_idx, neg_idx): each pair contributes
    relu(pred[..., pos] - pred[..., neg]) at every timestep.
    """
    price_indices_by_pair = {}
    for local_idx, global_idx in enumerate(target_feature_indices):
        col_name = embedding_metadata['columns'][global_idx]
        col_info = embedding_metadata['column_mapping'][col_name]
        if col_info['feature_type'] == 'price':
            pair = col_info['trading_pair']
            if pair not in price_indices_by_pair:
                price_indices_by_pair[pair] = {'bid': {}, 'ask': {}}
            price_indices_by_pair[pair][col_info['order_type']][col_info['level']] = local_idx

    terms = []
    for pair, price_indices in price_indices_by_pair.items():
        bid_cols = price_indices['bid']
        ask_cols = price_indices['ask']
        max_level = min(max(bid_cols.keys()) if bid_cols else 0,
                        max(ask_cols.keys()) if ask_cols else 0)
        if max_level < 2:
            continue
        for level in range(1, max_level):
            if level in ask_cols and level + 1 in ask_cols:
                # relu(ask_k - ask_{k+1})
                terms.append((ask_cols[level], ask_cols[level + 1]))
        for level in range(1, max_level):
            if level in bid_cols and level + 1 in bid_cols:
                # relu(bid_{k+1} - bid_k)
                terms.append((bid_cols[level + 1], bid_cols[level]))
        if 1 in bid_cols and 1 in ask_cols:
            # relu(bid_1 - ask_1)
            terms.append((bid_cols[1], ask_cols[1]))
    return terms


def _build_selection_matrix(terms, num_features):
    m_pad = max(128, _round_up(len(terms), 128))
    d = np.zeros((num_features, m_pad), dtype=np.float32)
    for col, (pos, neg) in enumerate(terms):
        d[pos, col] += 1.0
        d[neg, col] -= 1.0
    return d


def _structural_loss_kernel(pred_ref, d_ref, out_ref, acc_ref):
    j = pl.program_id(1)

    @pl.when(j == 0)
    def _init():
        acc_ref[...] = jnp.zeros_like(acc_ref)

    pred_tile = pred_ref[...].astype(jnp.float32)
    # Signed-selection "matmul": (TR, F) @ (F, M_pad) -> (TR, M_pad) in f32.
    viol = jnp.dot(pred_tile, d_ref[...], preferred_element_type=jnp.float32)
    # VPU relu + accumulate; no cross-lane reduction in the hot loop.
    acc_ref[...] += jnp.maximum(viol, 0.0)

    @pl.when(j == pl.num_programs(1) - 1)
    def _finalize():
        total = jnp.sum(acc_ref[...])
        out_ref[...] = jnp.broadcast_to(total, out_ref.shape).astype(out_ref.dtype)


def structural_loss_pallas(predictions, d_matrix, *, row_tile=512):
    batch, seq, feat = predictions.shape
    rows = batch * seq
    pred_flat = predictions.astype(jnp.float32).reshape(rows, feat)

    # Big row tiles for bandwidth; shrink for tiny inputs. Multiple of 8 (f32).
    tr = min(row_tile, _round_up(max(1, pl.cdiv(rows, _NUM_CORE_SPLITS)), 8))
    tiles_per_split = pl.cdiv(rows, _NUM_CORE_SPLITS * tr)
    rows_pad = _NUM_CORE_SPLITS * tiles_per_split * tr
    if rows_pad != rows:
        # Zero rows contribute relu(0 @ D) == 0 -> exact.
        pred_flat = jnp.pad(pred_flat, ((0, rows_pad - rows), (0, 0)))

    m_pad = d_matrix.shape[1]
    grid = (_NUM_CORE_SPLITS, tiles_per_split)

    partials = pl.pallas_call(
        _structural_loss_kernel,
        out_shape=jax.ShapeDtypeStruct((_NUM_CORE_SPLITS * 8, 128), jnp.float32),
        grid_spec=pltpu.PrefetchScalarGridSpec(
            num_scalar_prefetch=0,
            grid=grid,
            in_specs=[
                # pred streamed in (tr, feat) row tiles.
                pl.BlockSpec((tr, feat),
                             lambda c, j: (c * tiles_per_split + j, 0)),
                # D pinned in VMEM: constant index_map, fetched once.
                pl.BlockSpec((feat, m_pad), lambda c, j: (0, 0)),
            ],
            # Lane-dense (8, 128) block per core-split; written once (epilogue).
            out_specs=pl.BlockSpec((8, 128), lambda c, j: (c, 0)),
            scratch_shapes=[pltpu.VMEM((tr, m_pad), jnp.float32)],
        ),
        compiler_params=pltpu.CompilerParams(
            dimension_semantics=("parallel", "arbitrary"),
            vmem_limit_bytes=48 * 1024 * 1024,
        ),
    )(pred_flat, d_matrix)

    # One scalar partial per core split (broadcast over its block); combine.
    per_split = partials[::8, 0]
    return jnp.sum(per_split) / batch


class BinancePerpStructuralLoss:
    """JAX/Pallas equivalent of the PyTorch BinancePerpStructuralLoss."""

    def __init__(self, embedding_metadata, target_feature_indices):
        self.num_features = len(target_feature_indices)
        self.terms = _build_violation_terms(embedding_metadata,
                                            target_feature_indices)
        if self.terms:
            self.d_matrix = jnp.asarray(
                _build_selection_matrix(self.terms, self.num_features))
        else:
            self.d_matrix = None

    def __call__(self, predictions):
        if self.d_matrix is None:
            return jnp.float32(0.0)
        return structural_loss_pallas(predictions, self.d_matrix)

    forward = __call__


def _reference_loss(predictions, terms):
    batch = predictions.shape[0]
    pred = predictions.astype(jnp.float32)
    total = jnp.float32(0.0)
    for pos, neg in terms:
        total = total + jnp.sum(
            jnp.maximum(pred[:, :, pos] - pred[:, :, neg], 0.0)) / batch
    return total


def _make_demo_metadata():
    columns = []
    column_mapping = {}
    for pair in ("BTCUSDT", "ETHUSDT"):
        for order_type in ("bid", "ask"):
            for level in (1, 2, 3):
                name = f"{pair}_{order_type}_price_{level}"
                columns.append(name)
                column_mapping[name] = {
                    'feature_type': 'price',
                    'trading_pair': pair,
                    'order_type': order_type,
                    'level': level,
                }
        vol = f"{pair}_volume"
        columns.append(vol)
        column_mapping[vol] = {
            'feature_type': 'volume',
            'trading_pair': pair,
            'order_type': None,
            'level': None,
        }
    metadata = {'columns': columns, 'column_mapping': column_mapping}
    target_feature_indices = list(range(len(columns)))
    return metadata, target_feature_indices


if __name__ == "__main__":
    metadata, target_indices = _make_demo_metadata()
    loss_mod = BinancePerpStructuralLoss(metadata, target_indices)

    batch, seq = 2, 8
    feat = len(target_indices)  # 14
    key = jax.random.PRNGKey(0)
    predictions = jax.random.normal(key, (batch, seq, feat), dtype=jnp.float32)

    loss = loss_mod(predictions)
    loss = jax.block_until_ready(loss)

    ref = _reference_loss(predictions, loss_mod.terms)
    np.testing.assert_allclose(np.asarray(loss), np.asarray(ref),
                               rtol=2e-2, atol=2e-2)
    print("KERNEL_OK")
</pallas_src>

<mosaic_0001>
module attributes {stable_mosaic.version = 11 : i64} {
  func.func @_structural_loss_kernel(%arg0: i32, %arg1: i32, %arg2: memref<8x14xf32, #tpu.memory_space<vmem>>, %arg3: memref<14x128xf32, #tpu.memory_space<vmem>>, %arg4: memref<8x128xf32, #tpu.memory_space<vmem>>, %arg5: memref<8x128xf32, #tpu.memory_space<vmem>>) attributes {dimension_semantics = [#tpu.dimension_semantics<parallel>, #tpu.dimension_semantics<arbitrary>], iteration_bounds = array<i64: 2, 1>, scalar_prefetch = 0 : i64, scratch_operands = 1 : i64, tpu.core_type = #tpu.core_type<tc>, window_params = [{transform_indices = @transform_0, window_bounds = array<i64: 8, 14>}, {pipeline_mode = #tpu.pipeline_mode<synchronous>, transform_indices = @transform_1, window_bounds = array<i64: 14, 128>}, {transform_indices = @transform_2, window_bounds = array<i64: 8, 128>}]} {
    %c0_i32 = arith.constant 0 : i32
    %0 = arith.cmpi eq, %arg1, %c0_i32 : i32
    %1 = arith.extui %0 : i1 to i32
    %c0_i32_0 = arith.constant 0 : i32
    %2 = arith.cmpi ne, %1, %c0_i32_0 : i32
    scf.if %2 {
      %cst_11 = arith.constant 0.000000e+00 : f32
      %14 = vector.broadcast %cst_11 : f32 to vector<8x128xf32>
      %c0_12 = arith.constant 0 : index
      %c0_13 = arith.constant 0 : index
      %15 = vector.load %arg5[%c0_12, %c0_13] : memref<8x128xf32, #tpu.memory_space<vmem>>, vector<8x128xf32>
      tpu.vector_store %arg5[%c0_12, %c0_13], %14 {strides = array<i32>} : memref<8x128xf32, #tpu.memory_space<vmem>>, vector<8x128xf32>,
    } else {
    }
    %c0 = arith.constant 0 : index
    %c0_1 = arith.constant 0 : index
    %3 = vector.load %arg2[%c0, %c0_1] : memref<8x14xf32, #tpu.memory_space<vmem>>, vector<8x14xf32>
    %c0_2 = arith.constant 0 : index
    %c0_3 = arith.constant 0 : index
    %4 = vector.load %arg3[%c0_2, %c0_3] : memref<14x128xf32, #tpu.memory_space<vmem>>, vector<14x128xf32>
    %cst = arith.constant dense<0.000000e+00> : vector<8x128xf32>
    %5 = tpu.matmul %3, %4, %cst {dimension_numbers = #tpu.dot_dimension_numbers<[1], [0], [0], [1], [0, 0, 1, 1], [], []>} : vector<8x14xf32>, vector<14x128xf32>, vector<8x128xf32> -> vector<8x128xf32>
    %c0_4 = arith.constant 0 : index
    %c0_5 = arith.constant 0 : index
    %6 = vector.load %arg5[%c0_4, %c0_5] : memref<8x128xf32, #tpu.memory_space<vmem>>, vector<8x128xf32>
    %cst_6 = arith.constant 0.000000e+00 : f32
    %7 = vector.broadcast %cst_6 : f32 to vector<8x128xf32>
    %8 = arith.maximumf %5, %7 : vector<8x128xf32>
    %9 = arith.addf %6, %8 : vector<8x128xf32>
    %c0_7 = arith.constant 0 : index
    %c0_8 = arith.constant 0 : index
    %10 = vector.load %arg5[%c0_7, %c0_8] : memref<8x128xf32, #tpu.memory_space<vmem>>, vector<8x128xf32>
    tpu.vector_store %arg5[%c0_7, %c0_8], %9 {strides = array<i32>} : memref<8x128xf32, #tpu.memory_space<vmem>>, vector<8x128xf32>,
    %c0_i32_9 = arith.constant 0 : i32
    %11 = arith.cmpi eq, %arg1, %c0_i32_9 : i32
    %12 = arith.extui %11 : i1 to i32
    %c0_i32_10 = arith.constant 0 : i32
    %13 = arith.cmpi ne, %12, %c0_i32_10 : i32
    scf.if %13 {
      %c0_11 = arith.constant 0 : index
      %c0_12 = arith.constant 0 : index
      %14 = vector.load %arg5[%c0_11, %c0_12] : memref<8x128xf32, #tpu.memory_space<vmem>>, vector<8x128xf32>
      %15 = vector.shape_cast %14 : vector<8x128xf32> to vector<1x8x128xf32>
      %cst_13 = arith.constant dense<0.000000e+00> : vector<1xf32>
      %16 = vector.multi_reduction <add>, %15, %cst_13 [1, 2] : vector<1x8x128xf32> to vector<1xf32>
      %17 = vector.shape_cast %16 : vector<1xf32> to vector<1x1x1xf32>
      %18 = vector.extract %17[0, 0, 0] : f32 from vector<1x1x1xf32>
      %19 = vector.broadcast %18 : f32 to vector<8x128xf32>
      %c0_14 = arith.constant 0 : index
      %c0_15 = arith.constant 0 : index
      %20 = vector.load %arg4[%c0_14, %c0_15] : memref<8x128xf32, #tpu.memory_space<vmem>>, vector<8x128xf32>
      tpu.vector_store %arg4[%c0_14, %c0_15], %19 {strides = array<i32>} : memref<8x128xf32, #tpu.memory_space<vmem>>, vector<8x128xf32>,
    } else {
    }
    return
  }
  func.func @transform_0(%arg0: i32, %arg1: i32) -> (i32, i32) {
    %c1_i32 = arith.constant 1 : i32
    %0 = arith.muli %arg0, %c1_i32 : i32
    %1 = arith.addi %0, %arg1 : i32
    %c0_i32 = arith.constant 0 : i32
    %c0_i32_0 = arith.constant 0 : i32
    return %1, %c0_i32 : i32, i32
  }
  func.func @transform_1(%arg0: i32, %arg1: i32) -> (i32, i32) {
    %c0_i32 = arith.constant 0 : i32
    %c0_i32_0 = arith.constant 0 : i32
    %c0_i32_1 = arith.constant 0 : i32
    return %c0_i32, %c0_i32_0 : i32, i32
  }
  func.func @transform_2(%arg0: i32, %arg1: i32) -> (i32, i32) {
    %c0_i32 = arith.constant 0 : i32
    %c0_i32_0 = arith.constant 0 : i32
    return %arg0, %c0_i32 : i32, i32
  }
}

</mosaic_0001>

<llo_original>
// kernel: tpu_custom_call.1
$region0: #{tpu_custom_call.1}
  #allocation0 [shape = 'u32[]', space=smem, size = 0x4, offset = 0x4, fixed_abs, tag = 'smem constant byte address 0x4 - core index']
  #allocation1 [shape = 'u32[144,128]{1,0:T(1,128)}', space=vmem, size = 0x12000, scoped, tag = 'internal scratch']
  #allocation2 [shape = 'f32[8,128]{1,0:T(8,128)}', space=vmem, size = 0x1000, scoped, tag = 'scratch operand']
  %s0 = inlined_call_operand.hbm [shape: f32[16,14], index: 0, kind: input, shape index: {}]
  %s1 = inlined_call_operand.hbm [shape: f32[14,128], index: 1, kind: input, shape index: {}]
  %s2 = inlined_call_operand.hbm [shape: f32[16,128], index: 2, kind: output, shape index: {}]
  %s3 = sld [smem:[#allocation0]]
  $region57: #{tpu_custom_call.1} parent=0
    _
  %s5 = ssub.s32 1, %s3
  %s6 = scalar_select 0, %s5, %s3
  $region1: #{tpu_custom_call.1} parent=0
    #allocation3 [shape = 'u8[8192]{0}', space=vmem, size = 0x2000, scoped, tag = 'input window, operand 0']
    #allocation4 [shape = 's32[2]{0}', space=sflag, size = 0x8, scoped, tag = 'scoped memory for tpu_custom_call.1']
    #allocation5 [shape = 's32[2]{0}', space=sflag, size = 0x8, scoped, tag = 'scoped memory for tpu_custom_call.1']
    #allocation6 [shape = 'u8[8192]{0}', space=vmem, size = 0x2000, scoped, tag = 'input window, operand 1, single buffered']
    #allocation7 [shape = 's32[1]{0}', space=sflag, size = 0x4, scoped, tag = 'scoped memory for tpu_custom_call.1']
    #allocation8 [shape = 'u8[8192]{0}', space=vmem, size = 0x2000, scoped, tag = 'output window, operand 0']
    %7 = vsyncpa [#allocation4], 0
    %s8 = scalar_lea.sflag [#allocation4], 1
    %9 = vsyncpa %s8, 0
    %10 = vsyncpa [#allocation7], 0
    %11 = vsyncpa [#allocation5], 0
    %s12 = scalar_lea.sflag [#allocation5], 1
    %13 = vsyncpa %s12, 0
    loop: start=0, step=1, limit=4
    $region2: #{tpu_custom_call.1} parent=1 // loop_pre_header
      _
    $region3: #{tpu_custom_call.1} parent=1 // loop_header
      %s15 = sphi 0, %s19
      %p16 = scmp.ge.s32.totalorder %s15, 4
      %s22 = sphi 0, %s34
      %s23 = sphi 0, %s30
      %s24 = sphi 0, %s22
      %s25 = sphi 0, %s23
      %s26 = sphi 0, %s24
      %s27 = sphi 0, %s25
      %s39 = sphi 0, %s41
      %s42 = sphi 0, %s39
      %s43 = sphi 0, %s42
      %s59 = sphi 0, %s43
      %s63 = sphi 0, %s63
      %s65 = sphi 0, %s63
      %s66 = sphi 0, %s65
      %s80 = sphi 0, %s66
      %s86 = sphi 0, %s88
      %s89 = sphi 0, %s86
      %s90 = sphi 0, %s89
      %s106 = sphi 0, %s90
    $region4: #{tpu_custom_call.1} parent=1 // loop_header_branch
      %18 = sbr.rel (%p16) target = $region8
    $region5: #{tpu_custom_call.1} parent=1 // loop_body
      %s20 = ssub.s32 %s15, 1
      %s21 = ssub.s32 %s15, 2
      %s28 = sadd.s32 1, %s23
      %p29 = scmp.ge.s32.totalorder %s28, 1
      %s30 = scalar_select %p29, 0, %s28
      %s31 = sadd.s32 1, %s22
      %s32 = scalar_select %p29, %s31, %s22
      %p33 = scmp.ge.s32.totalorder %s32, 2
      %s34 = scalar_select %p33, 0, %s32
      %s35 = sadd.s32 %s22, %s23
      %s36 = sadd.s32 %s34, %s30
      %s37 = ssub.s32 %s35, %s36
      %p38 = scmp.eq.s32.totalorder %s37, 0
      %s40 = sadd.s32 %s39, 1
      %s41 = scalar_select %p38, %s39, %s40
      %p44 = pneg %p38
      %p45 = scmp.eq.s32.totalorder %s15, 1
      %p46 = por %p44, %p45
      %p47 = scmp.ne.s32.totalorder %s39, %s42
      %p48 = scmp.eq.s32.totalorder %s15, 0
      %p49 = por %p47, %p48
      %p50 = scmp.ne.s32.totalorder %s39, %s42
      %p51 = scmp.eq.s32.totalorder %s20, 1
      %p52 = por %p50, %p51
      %p53 = scmp.ne.s32.totalorder %s42, %s43
      %p54 = scmp.eq.s32.totalorder %s20, 0
      %p55 = por %p53, %p54
      %p56 = scmp.ne.s32.totalorder %s42, %s43
      %p57 = scmp.eq.s32.totalorder %s21, 1
      %p58 = por %p56, %p57
      %p60 = scmp.ne.s32.totalorder %s43, %s59
      %p61 = scmp.eq.s32.totalorder %s21, 0
      %p62 = por %p60, %p61
      %s64 = sadd.s32 %s63, 1
      %p67 = scmp.eq.s32.totalorder %s15, 1
      %p68 = scmp.ne.s32.totalorder %s63, %s65
      %p69 = scmp.eq.s32.totalorder %s15, 0
      %p70 = por %p68, %p69
      %p71 = scmp.ne.s32.totalorder %s63, %s65
      %p72 = scmp.eq.s32.totalorder %s20, 1
      %p73 = por %p71, %p72
      %p74 = scmp.ne.s32.totalorder %s65, %s66
      %p75 = scmp.eq.s32.totalorder %s20, 0
      %p76 = por %p74, %p75
      %p77 = scmp.ne.s32.totalorder %s65, %s66
      %p78 = scmp.eq.s32.totalorder %s21, 1
      %p79 = por %p77, %p78
      %p81 = scmp.ne.s32.totalorder %s66, %s80
      %p82 = scmp.eq.s32.totalorder %s21, 0
      %p83 = por %p81, %p82
      %s84 = ssub.s32 %s22, %s34
      %p85 = scmp.eq.s32.totalorder %s84, 0
      %s87 = sadd.s32 %s86, 1
      %s88 = scalar_select %p85, %s86, %s87
      %p91 = pneg %p85
      %p92 = scmp.eq.s32.totalorder %s15, 1
      %p93 = por %p91, %p92
      %p94 = scmp.ne.s32.totalorder %s86, %s89
      %p95 = scmp.eq.s32.totalorder %s15, 0
      %p96 = por %p94, %p95
      %p97 = scmp.ne.s32.totalorder %s86, %s89
      %p98 = scmp.eq.s32.totalorder %s20, 1
      %p99 = por %p97, %p98
      %p100 = scmp.ne.s32.totalorder %s89, %s90
      %p101 = scmp.eq.s32.totalorder %s20, 0
      %p102 = por %p100, %p101
      %p103 = scmp.ne.s32.totalorder %s89, %s90
      %p104 = scmp.eq.s32.totalorder %s21, 1
      %p105 = por %p103, %p104
      %p107 = scmp.ne.s32.totalorder %s90, %s106
      %p108 = scmp.eq.s32.totalorder %s21, 0
      %p109 = por %p107, %p108
      %p110 = scmp.le.s32.totalorder 1, %s15
      %p111 = scmp.lt.s32.totalorder %s15, 3
      %p112 = pnand %p110, %p111
      %p113 = pneg %p112
      // Predicated region
      $region9: #{tpu_custom_call.1} parent=5 // pred_check
        _
      $region10: #{tpu_custom_call.1} parent=5 // pred_check_branch
        %115 = sbr.rel (%p112) target = $region12
      $region11: #{tpu_custom_call.1} parent=5 // pred_region
        %s116 = ssub.s32 %s15, 1
        // Predicated region
        $region13: #{tpu_custom_call.1} parent=11 // pred_check
          %p117 = pneg %p76
        $region14: #{tpu_custom_call.1} parent=11 // pred_check_branch
          %119 = sbr.rel (%p117) target = $region16
        $region15: #{tpu_custom_call.1} parent=11 // pred_region
          %s121 = ssub.s32 256, 256
          %122 = vsyncadd [#allocation7], %s121
          %s123 = sshll.u32 [#allocation6], 4
          %s124 = int_to_ptr.vmem [resolvable:$true] %s123
          %129 = dma.hbm_to_vmem [thread:$0]  %s1, 256, %s124, [#allocation7], 128, 128, 8
        $region16: #{tpu_custom_call.1} parent=11 // pred_fallthru
          _
      $region12: #{tpu_custom_call.1} parent=5 // pred_fallthru
        _
      %p130 = scmp.lt.s32.totalorder %s15, 2
      // Predicated region
      $region17: #{tpu_custom_call.1} parent=5 // pred_check
        %p131 = pneg %p130
      $region18: #{tpu_custom_call.1} parent=5 // pred_check_branch
        %133 = sbr.rel (%p131) target = $region20
      $region19: #{tpu_custom_call.1} parent=5 // pred_region
        // Predicated region
        $region21: #{tpu_custom_call.1} parent=19 // pred_check
          %p134 = pneg %p49
        $region22: #{tpu_custom_call.1} parent=19 // pred_check_branch
          %136 = sbr.rel (%p134) target = $region24
        $region23: #{tpu_custom_call.1} parent=19 // pred_region
          %s137 = sand.u32 %s39, 1
          %s138 = scalar_lea.sflag [#allocation4], %s137
          %s139 = sand.u32 %s39, 1
          %s140 = smul.addr %s139, 8
          %s141 = scalar_lea.vmem [#allocation3], %s140
          %s142 = sadd.s32 %s22, %s23
          %s144 = ssub.s32 128, 128
          %145 = vsyncadd %s138, %s144
          %s146 = smul.addr %s142, 128
          %s147 = scalar_lea.hbm %s0, %s146
          %s149 = sshll.u32 %s141, 4
          %s150 = int_to_ptr.vmem [resolvable:$true] %s149
          %152 = dma.hbm_to_vmem [thread:$0]  %s147, 128, %s150, %s138
        $region24: #{tpu_custom_call.1} parent=19 // pred_fallthru
          _
      $region20: #{tpu_custom_call.1} parent=5 // pred_fallthru
        _
      %p153 = scmp.le.s32.totalorder 1, %s15
      %p154 = scmp.lt.s32.totalorder %s15, 3
      %p155 = pnand %p153, %p154
      %p156 = pneg %p155
      // Predicated region
      $region25: #{tpu_custom_call.1} parent=5 // pred_check
        _
      $region26: #{tpu_custom_call.1} parent=5 // pred_check_branch
        %158 = sbr.rel (%p155) target = $region28
      $region27: #{tpu_custom_call.1} parent=5 // pred_region
        %s159 = ssub.s32 %s15, 1
        %s160 = sand.u32 %s42, 1
        %s161 = scalar_lea.sflag [#allocation4], %s160
        %s162 = sand.u32 %s42, 1
        %s163 = smul.addr %s162, 8
        %s164 = scalar_lea.vmem [#allocation3], %s163
        // Predicated region
        $region29: #{tpu_custom_call.1} parent=27 // pred_check
          %p165 = pneg %p55
        $region30: #{tpu_custom_call.1} parent=27 // pred_check_branch
          %167 = sbr.rel (%p165) target = $region32
        $region31: #{tpu_custom_call.1} parent=27 // pred_region
          %168 = dma.done %s161, 128
        $region32: #{tpu_custom_call.1} parent=27 // pred_fallthru
          _
        // Predicated region
        $region33: #{tpu_custom_call.1} parent=27 // pred_check
          %p169 = pneg %p76
        $region34: #{tpu_custom_call.1} parent=27 // pred_check_branch
          %171 = sbr.rel (%p169) target = $region36
        $region35: #{tpu_custom_call.1} parent=27 // pred_region
          %172 = dma.done [#allocation7], 256
        $region36: #{tpu_custom_call.1} parent=27 // pred_fallthru
          _
        %s173 = sand.u32 %s42, 1
        %s174 = scalar_lea.sflag [#allocation4], %s173
        %s175 = sand.u32 %s42, 1
        %s176 = smul.addr %s175, 8
        %s177 = scalar_lea.vmem [#allocation3], %s176
        %p178 = pneg %p55
        %p179 = pneg %p52
        %p180 = pneg %p76
        %p181 = pneg %p73
        %p182 = pneg %p102
        %p183 = pneg %p99
        %s184 = sand.u32 %s89, 1
        %s185 = scalar_lea.sflag [#allocation5], %s184
        %s186 = sand.u32 %s89, 1
        %s187 = smul.addr %s186, 8
        %s188 = scalar_lea.vmem [#allocation8], %s187
        %s189 = sadd.s32 %s24, %s25
        %p190 = scmp.eq.s32.totalorder %s25, 0
        // Predicated region
        $region37: #{tpu_custom_call.1} parent=27 // pred_check
          %p191 = pneg %p190
        $region38: #{tpu_custom_call.1} parent=27 // pred_check_branch
          %193 = sbr.rel (%p191) target = $region40
        $region39: #{tpu_custom_call.1} parent=27 // pred_region
          %194 = vst [vmem:[#allocation2] sm:$0xff] 0.0
        $region40: #{tpu_custom_call.1} parent=27 // pred_fallthru
          _
        %v195 = vld [vmem:[%s164] sm:$0xff]
        %v196 = vld [vmem:[#allocation6] sm:$0xff]
        %v197 = vld [vmem:[#allocation6 + $0x8] sm:$0x3f]
        %vm198 = vcmask 113664
        %v200 = vsel %vm198, %v195, 0
        %vm202 = vcmask 1045504
        %v204 = vsel %vm202, %v197, 0
        %206 = vmatprep.subr.mxu0 0.0
        %207 = vmatpush1.msra.mxu0 0.0
        %208 = vmatprep.subr.mxu0 0.0
        %209 = vmatpush1.msra.mxu0 0.0
        %210 = vmatprep.subr.mxu0 0.0
        %211 = vmatpush1.msra.mxu0 0.0
        %212 = vmatprep.subr.mxu0 0.0
        %213 = vmatpush1.msra.mxu0 0.0
        %214 = vmatprep.subr.mxu0 0.0
        %215 = vmatpush1.msra.mxu0 0.0
        %216 = vmatprep.subr.mxu0 0.0
        %217 = vmatpush1.msra.mxu0 0.0
        %218 = vmatprep.subr.mxu0 0.0
        %219 = vmatpush1.msra.mxu0 0.0
        %220 = vmatprep.subr.mxu0 0.0
        %221 = vmatpush1.msra.mxu0 0.0
        %222 = vmatprep.subr.mxu0 0.0
        %223 = vmatpush1.msra.mxu0 0.0
        %224 = vmatprep.subr.mxu0 0.0
        %225 = vmatpush1.msra.mxu0 0.0
        %226 = vmatprep.subr.mxu0 0.0
        %227 = vmatpush1.msra.mxu0 0.0
        %228 = vmatprep.subr.mxu0 0.0
        %229 = vmatpush1.msra.mxu0 0.0
        %230 = vmatprep.subr.mxu0 0.0
        %231 = vmatpush1.msra.mxu0 0.0
        %232 = vmatprep.subr.mxu0 0.0
        %233 = vmatpush1.msra.mxu0 0.0
        %234 = vmatprep.subr.mxu0 0.0
        %235 = vmatpush1.msra.mxu0 %v204
        %236 = vmatprep.subr.mxu0 0.0
        %237 = vmatpush1.msra.mxu0 %v196
        %238 = vmatprep.subr.mxu0 0.0
        %239 = vmatpush2.msra.mxu0 0.0
        %240 = vmatprep.subr.mxu0 0.0
        %241 = vmatpush2.msra.mxu0 0.0
        %242 = vmatprep.subr.mxu0 0.0
        %243 = vmatpush2.msra.mxu0 0.0
        %244 = vmatprep.subr.mxu0 0.0
        %245 = vmatpush2.msra.mxu0 0.0
        %246 = vmatprep.subr.mxu0 0.0
        %247 = vmatpush2.msra.mxu0 0.0
        %248 = vmatprep.subr.mxu0 0.0
        %249 = vmatpush2.msra.mxu0 0.0
        %250 = vmatprep.subr.mxu0 0.0
        %251 = vmatpush2.msra.mxu0 0.0
        %252 = vmatprep.subr.mxu0 0.0
        %253 = vmatpush2.msra.mxu0 0.0
        %254 = vmatprep.subr.mxu0 0.0
        %255 = vmatpush2.msra.mxu0 0.0
        %256 = vmatprep.subr.mxu0 0.0
        %257 = vmatpush2.msra.mxu0 0.0
        %258 = vmatprep.subr.mxu0 0.0
        %259 = vmatpush2.msra.mxu0 0.0
        %260 = vmatprep.subr.mxu0 0.0
        %261 = vmatpush2.msra.mxu0 0.0
        %262 = vmatprep.subr.mxu0 0.0
        %263 = vmatpush2.msra.mxu0 0.0
        %264 = vmatprep.subr.mxu0 0.0
        %265 = vmatpush2.msra.mxu0 0.0
        %266 = vmatprep.subr.mxu0 0.0
        %267 = vmatpush2.msra.mxu0 0.0
        %268 = vmatprep.subr.mxu0 0.0
        %269 = vmatpush2.msra.mxu0 0.0
        %270 = vmatprep.mubr.f32.mxu0 0.0
        %271 = vmatmul.mubr.f32.gmra.mxu0 %v200
        %v272 = vpop.f32.mrf.mxu0
        %v273 = vadd.f32 0.0, %v272
        %v274 = vpop.f32.mrf.mxu0
        %275 = vdwg.mxu0
        %v276 = vld [vmem:[#allocation2] sm:$0xff]
        %v277 = vmax.f32 %v273, 0.0
        %v278 = vadd.f32 %v276, %v277
        %279 = vst [vmem:[#allocation2] sm:$0xff] %v278
        // Predicated region
        $region41: #{tpu_custom_call.1} parent=27 // pred_check
          %p280 = pneg %p190
        $region42: #{tpu_custom_call.1} parent=27 // pred_check_branch
          %282 = sbr.rel (%p280) target = $region44
        $region43: #{tpu_custom_call.1} parent=27 // pred_region
          %v283 = vld [vmem:[#allocation2] sm:$0xff]
          %284 = vadd.xlane.f32.xlu0 %v283
          %v285 = vpop.xlane.xlu0 %284
          %v286 = vrot.slane %v285, 4
          %v287 = vadd.f32 %v285, %v286
          %v288 = vrot.slane %v287, 2
          %v289 = vadd.f32 %v287, %v288
          %v290 = vrot.slane %v289, 1
          %v291 = vadd.f32 %v289, %v290
          %s292 = vtos %v291
          %v293 = vstv %s292
          %294 = vst [vmem:[%s188] sm:$0xff] %v293
        $region44: #{tpu_custom_call.1} parent=27 // pred_fallthru
          _
        %s295 = sand.u32 %s89, 1
        %s296 = scalar_lea.sflag [#allocation5], %s295
        %s297 = sand.u32 %s89, 1
        %s298 = smul.addr %s297, 8
        %s299 = scalar_lea.vmem [#allocation8], %s298
        // Predicated region
        $region45: #{tpu_custom_call.1} parent=27 // pred_check
          %p300 = pneg %p99
        $region46: #{tpu_custom_call.1} parent=27 // pred_check_branch
          %302 = sbr.rel (%p300) target = $region48
        $region47: #{tpu_custom_call.1} parent=27 // pred_region
          %s304 = ssub.s32 128, 128
          %305 = vsyncadd %s296, %s304
          %s306 = smul.addr %s24, 128
          %s307 = scalar_lea.hbm %s2, %s306
          %s309 = sshll.u32 %s299, 4
          %s310 = int_to_ptr.vmem [resolvable:$true] %s309
          %312 = dma.vmem_to_hbm [thread:$0]  %s310, 128, %s307, %s296
        $region48: #{tpu_custom_call.1} parent=27 // pred_fallthru
          _
      $region28: #{tpu_custom_call.1} parent=5 // pred_fallthru
        _
      %p313 = scmp.le.s32.totalorder 2, %s15
      // Predicated region
      $region49: #{tpu_custom_call.1} parent=5 // pred_check
        %p314 = pneg %p313
      $region50: #{tpu_custom_call.1} parent=5 // pred_check_branch
        %316 = sbr.rel (%p314) target = $region52
      $region51: #{tpu_custom_call.1} parent=5 // pred_region
        %s317 = ssub.s32 %s15, 2
        // Predicated region
        $region53: #{tpu_custom_call.1} parent=51 // pred_check
          %p318 = pneg %p105
        $region54: #{tpu_custom_call.1} parent=51 // pred_check_branch
          %320 = sbr.rel (%p318) target = $region56
        $region55: #{tpu_custom_call.1} parent=51 // pred_region
          %s321 = sand.u32 %s90, 1
          %s322 = scalar_lea.sflag [#allocation5], %s321
          %s323 = sand.u32 %s90, 1
          %s324 = smul.addr %s323, 8
          %s325 = scalar_lea.vmem [#allocation8], %s324
          %326 = dma.done %s322, 128
        $region56: #{tpu_custom_call.1} parent=51 // pred_fallthru
          _
      $region52: #{tpu_custom_call.1} parent=5 // pred_fallthru
        _
    $region6: #{tpu_custom_call.1} parent=1 // loop_footer
      %s19 = sadd.s32 1, %s15
    $region7: #{tpu_custom_call.1} parent=1 // loop_footer_branch
      %14 = sbr.rel target = $region3
    $region8: #{tpu_custom_call.1} parent=1 // loop_exit
      _
    %327 = vsyncpa [#allocation4], 1
    %s328 = scalar_lea.sflag [#allocation4], 1
    %329 = vsyncpa %s328, 1
    %330 = vsyncpa [#allocation7], 1
    %331 = vsyncpa [#allocation5], 1
    %s332 = scalar_lea.sflag [#allocation5], 1
    %333 = vsyncpa %s332, 1

</llo_original>
